<compile_context>
chip_gen: v7x
topology: tpu7x:2x2x1
jax: 0.10.0
libtpu: 0.0.40
codegen_flags: <defaults>
</compile_context>

<pallas_src>
import jax
import jax.numpy as jnp
from jax.experimental import pallas as pl
from jax.experimental.pallas import tpu as pltpu

HID1, HID2, HID3 = 128, 256, 128
OUT_PAD = 128                                # final layer padded to 128 lanes
BIAS_PACKED = HID1 + HID2 + HID3 + OUT_PAD   # 640 (every slice 128-aligned)


def _round_up(n, m):
    return ((n + m - 1) // m) * m


def dqn_kernel(x_ref, w1_ref, w2_ref, w3_ref, w4_ref, b_ref, out_ref):
    # Static, 128-aligned slices of the packed bias vector (f32, [1, N]).
    b1 = b_ref[:, 0:HID1]
    b2 = b_ref[:, HID1:HID1 + HID2]
    b3 = b_ref[:, HID1 + HID2:HID1 + HID2 + HID3]
    b4 = b_ref[:, HID1 + HID2 + HID3:BIAS_PACKED]

    # Layer 1: Linear(n_states -> 128) + ReLU   (bf16 MXU, f32 accumulate)
    x = x_ref[...].astype(jnp.bfloat16)
    h = jnp.dot(x, w1_ref[...], preferred_element_type=jnp.float32) + b1
    h = jnp.maximum(h, 0.0).astype(jnp.bfloat16)
    # Layer 2: Linear(128 -> 256) + ReLU
    h = jnp.dot(h, w2_ref[...], preferred_element_type=jnp.float32) + b2
    h = jnp.maximum(h, 0.0).astype(jnp.bfloat16)
    # Layer 3: Linear(256 -> 128) + ReLU
    h = jnp.dot(h, w3_ref[...], preferred_element_type=jnp.float32) + b3
    h = jnp.maximum(h, 0.0).astype(jnp.bfloat16)
    # Layer 4: Linear(128 -> 128-padded n_actions), no activation
    q = jnp.dot(h, w4_ref[...], preferred_element_type=jnp.float32) + b4
    out_ref[...] = q.astype(out_ref.dtype)


def dqn_forward(x, kernel_params, n_actions, tile_b=512):
    """x: [B, n_states] f32.  kernel_params: (w1,w2,w3,w4_padded,b_packed)."""
    w1, w2, w3, w4, b_packed = kernel_params
    B, n_states = x.shape

    # Batch tile: multiple of 8 (sublane), capped so double-buffered tiles +
    # live intermediates stay well inside scoped VMEM on all chips.
    tb = min(tile_b, _round_up(B, 8))
    B_pad = _round_up(B, tb)
    if B_pad != B:
        x = jnp.pad(x, ((0, B_pad - B), (0, 0)))

    resident = lambda i: (0, 0)   # weights/bias: same block every grid step

    out = pl.pallas_call(
        dqn_kernel,
        out_shape=jax.ShapeDtypeStruct((B_pad, OUT_PAD), jnp.float32),
        grid=(B_pad // tb,),
        in_specs=[
            pl.BlockSpec((tb, n_states), lambda i: (i, 0)),   # x, batch-tiled
            pl.BlockSpec((n_states, HID1), resident),         # w1
            pl.BlockSpec((HID1, HID2), resident),             # w2
            pl.BlockSpec((HID2, HID3), resident),             # w3
            pl.BlockSpec((HID3, OUT_PAD), resident),          # w4 (padded)
            pl.BlockSpec((1, BIAS_PACKED), resident),         # packed biases
        ],
        out_specs=pl.BlockSpec((tb, OUT_PAD), lambda i: (i, 0)),
        compiler_params=pltpu.CompilerParams(
            dimension_semantics=("parallel",),
        ),
    )(x, w1, w2, w3, w4, b_packed)

    return out[:B, :n_actions]


def init_params(key, n_states, n_actions):
    """PyTorch-default uniform(-1/sqrt(fan_in)) init, [in, out] weight layout."""
    dims = [(n_states, HID1), (HID1, HID2), (HID2, HID3), (HID3, n_actions)]
    ws, bs = [], []
    for fan_in, fan_out in dims:
        kw, kb, key = jax.random.split(key, 3)
        scale = 1.0 / float(fan_in) ** 0.5
        ws.append(jax.random.uniform(kw, (fan_in, fan_out), jnp.float32, -scale, scale))
        bs.append(jax.random.uniform(kb, (1, fan_out), jnp.float32, -scale, scale))
    return ws, bs


def pack_params(ws, bs, n_actions):
    """Kernel layout: bf16 weights, final layer padded to 128 lanes, biases packed."""
    w1, w2, w3, w4 = [w.astype(jnp.bfloat16) for w in ws]
    w4 = jnp.pad(w4, ((0, 0), (0, OUT_PAD - n_actions)))          # zero columns
    b4 = jnp.pad(bs[3], ((0, 0), (0, OUT_PAD - n_actions)))
    b_packed = jnp.concatenate([bs[0], bs[1], bs[2], b4], axis=1).astype(jnp.float32)
    return (w1, w2, w3, w4, b_packed)


def reference_forward(x, kernel_params, n_actions):
    """Pure-JAX reference replicating the kernel's bf16/f32 math."""
    w1, w2, w3, w4, bp = kernel_params
    b1 = bp[:, :HID1]
    b2 = bp[:, HID1:HID1 + HID2]
    b3 = bp[:, HID1 + HID2:HID1 + HID2 + HID3]
    b4 = bp[:, HID1 + HID2 + HID3:]
    h = x.astype(jnp.bfloat16)
    h = jnp.maximum(jnp.dot(h, w1, preferred_element_type=jnp.float32) + b1, 0.0).astype(jnp.bfloat16)
    h = jnp.maximum(jnp.dot(h, w2, preferred_element_type=jnp.float32) + b2, 0.0).astype(jnp.bfloat16)
    h = jnp.maximum(jnp.dot(h, w3, preferred_element_type=jnp.float32) + b3, 0.0).astype(jnp.bfloat16)
    q = jnp.dot(h, w4, preferred_element_type=jnp.float32) + b4
    return q[:, :n_actions]


if __name__ == "__main__":
    # CartPole: observation dim 4, action space of size 2; small batch.
    n_states, n_actions, batch = 4, 2, 8

    key = jax.random.PRNGKey(0)
    kx, kp = jax.random.split(key)
    x = jax.random.normal(kx, (batch, n_states), jnp.float32)
    ws, bs = init_params(kp, n_states, n_actions)
    params = pack_params(ws, bs, n_actions)

    q = dqn_forward(x, params, n_actions)
    q = jax.block_until_ready(q)

    q_ref = reference_forward(x, params, n_actions)
    assert q.shape == (batch, n_actions)
    assert jnp.allclose(q, q_ref, atol=5e-2, rtol=5e-2), "mismatch vs JAX reference"

    print("KERNEL_OK")
</pallas_src>

<mosaic_0001>
module attributes {stable_mosaic.version = 11 : i64} {
  func.func @dqn_kernel(%arg0: i32, %arg1: memref<8x4xf32, #tpu.memory_space<vmem>>, %arg2: memref<4x128xbf16, #tpu.memory_space<vmem>>, %arg3: memref<128x256xbf16, #tpu.memory_space<vmem>>, %arg4: memref<256x128xbf16, #tpu.memory_space<vmem>>, %arg5: memref<128x128xbf16, #tpu.memory_space<vmem>>, %arg6: memref<1x640xf32, #tpu.memory_space<vmem>>, %arg7: memref<8x128xf32, #tpu.memory_space<vmem>>) attributes {dimension_semantics = [#tpu.dimension_semantics<parallel>], iteration_bounds = array<i64: 1>, scalar_prefetch = 0 : i64, scratch_operands = 0 : i64, tpu.core_type = #tpu.core_type<tc>, window_params = [{transform_indices = @transform_0, window_bounds = array<i64: 8, 4>}, {pipeline_mode = #tpu.pipeline_mode<synchronous>, transform_indices = @transform_1, window_bounds = array<i64: 4, 128>}, {pipeline_mode = #tpu.pipeline_mode<synchronous>, transform_indices = @transform_2, window_bounds = array<i64: 128, 256>}, {pipeline_mode = #tpu.pipeline_mode<synchronous>, transform_indices = @transform_3, window_bounds = array<i64: 256, 128>}, {pipeline_mode = #tpu.pipeline_mode<synchronous>, transform_indices = @transform_4, window_bounds = array<i64: 128, 128>}, {pipeline_mode = #tpu.pipeline_mode<synchronous>, transform_indices = @transform_5, window_bounds = array<i64: 1, 640>}, {transform_indices = @transform_6, window_bounds = array<i64: 8, 128>}]} {
    %c0 = arith.constant 0 : index
    %c0_0 = arith.constant 0 : index
    %0 = vector.load %arg6[%c0, %c0_0] : memref<1x640xf32, #tpu.memory_space<vmem>>, vector<1x128xf32>
    %c0_1 = arith.constant 0 : index
    %c128 = arith.constant 128 : index
    %1 = vector.load %arg6[%c0_1, %c128] : memref<1x640xf32, #tpu.memory_space<vmem>>, vector<1x256xf32>
    %c0_2 = arith.constant 0 : index
    %c384 = arith.constant 384 : index
    %2 = vector.load %arg6[%c0_2, %c384] : memref<1x640xf32, #tpu.memory_space<vmem>>, vector<1x128xf32>
    %c0_3 = arith.constant 0 : index
    %c512 = arith.constant 512 : index
    %3 = vector.load %arg6[%c0_3, %c512] : memref<1x640xf32, #tpu.memory_space<vmem>>, vector<1x128xf32>
    %c0_4 = arith.constant 0 : index
    %c0_5 = arith.constant 0 : index
    %4 = vector.load %arg1[%c0_4, %c0_5] : memref<8x4xf32, #tpu.memory_space<vmem>>, vector<8x4xf32>
    %5 = arith.truncf %4 : vector<8x4xf32> to vector<8x4xbf16>
    %c0_6 = arith.constant 0 : index
    %c0_7 = arith.constant 0 : index
    %6 = vector.load %arg2[%c0_6, %c0_7] : memref<4x128xbf16, #tpu.memory_space<vmem>>, vector<4x128xbf16>
    %cst = arith.constant dense<0.000000e+00> : vector<8x128xf32>
    %7 = tpu.matmul %5, %6, %cst {dimension_numbers = #tpu.dot_dimension_numbers<[1], [0], [0], [1], [0, 0, 1, 1], [], []>} : vector<8x4xbf16>, vector<4x128xbf16>, vector<8x128xf32> -> vector<8x128xf32>
    %8 = vector.broadcast %0 : vector<1x128xf32> to vector<8x128xf32>
    %9 = arith.addf %7, %8 : vector<8x128xf32>
    %cst_8 = arith.constant 0.000000e+00 : f32
    %10 = vector.broadcast %cst_8 : f32 to vector<8x128xf32>
    %11 = arith.maximumf %9, %10 : vector<8x128xf32>
    %12 = arith.truncf %11 : vector<8x128xf32> to vector<8x128xbf16>
    %c0_9 = arith.constant 0 : index
    %c0_10 = arith.constant 0 : index
    %13 = vector.load %arg3[%c0_9, %c0_10] : memref<128x256xbf16, #tpu.memory_space<vmem>>, vector<128x256xbf16>
    %cst_11 = arith.constant dense<0.000000e+00> : vector<8x256xf32>
    %14 = tpu.matmul %12, %13, %cst_11 {dimension_numbers = #tpu.dot_dimension_numbers<[1], [0], [0], [1], [0, 0, 1, 1], [], []>} : vector<8x128xbf16>, vector<128x256xbf16>, vector<8x256xf32> -> vector<8x256xf32>
    %15 = vector.broadcast %1 : vector<1x256xf32> to vector<8x256xf32>
    %16 = arith.addf %14, %15 : vector<8x256xf32>
    %cst_12 = arith.constant 0.000000e+00 : f32
    %17 = vector.broadcast %cst_12 : f32 to vector<8x256xf32>
    %18 = arith.maximumf %16, %17 : vector<8x256xf32>
    %19 = arith.truncf %18 : vector<8x256xf32> to vector<8x256xbf16>
    %c0_13 = arith.constant 0 : index
    %c0_14 = arith.constant 0 : index
    %20 = vector.load %arg4[%c0_13, %c0_14] : memref<256x128xbf16, #tpu.memory_space<vmem>>, vector<256x128xbf16>
    %cst_15 = arith.constant dense<0.000000e+00> : vector<8x128xf32>
    %21 = tpu.matmul %19, %20, %cst_15 {dimension_numbers = #tpu.dot_dimension_numbers<[1], [0], [0], [1], [0, 0, 1, 1], [], []>} : vector<8x256xbf16>, vector<256x128xbf16>, vector<8x128xf32> -> vector<8x128xf32>
    %22 = vector.broadcast %2 : vector<1x128xf32> to vector<8x128xf32>
    %23 = arith.addf %21, %22 : vector<8x128xf32>
    %cst_16 = arith.constant 0.000000e+00 : f32
    %24 = vector.broadcast %cst_16 : f32 to vector<8x128xf32>
    %25 = arith.maximumf %23, %24 : vector<8x128xf32>
    %26 = arith.truncf %25 : vector<8x128xf32> to vector<8x128xbf16>
    %c0_17 = arith.constant 0 : index
    %c0_18 = arith.constant 0 : index
    %27 = vector.load %arg5[%c0_17, %c0_18] : memref<128x128xbf16, #tpu.memory_space<vmem>>, vector<128x128xbf16>
    %cst_19 = arith.constant dense<0.000000e+00> : vector<8x128xf32>
    %28 = tpu.matmul %26, %27, %cst_19 {dimension_numbers = #tpu.dot_dimension_numbers<[1], [0], [0], [1], [0, 0, 1, 1], [], []>} : vector<8x128xbf16>, vector<128x128xbf16>, vector<8x128xf32> -> vector<8x128xf32>
    %29 = vector.broadcast %3 : vector<1x128xf32> to vector<8x128xf32>
    %30 = arith.addf %28, %29 : vector<8x128xf32>
    %c0_20 = arith.constant 0 : index
    %c0_21 = arith.constant 0 : index
    %31 = vector.load %arg7[%c0_20, %c0_21] : memref<8x128xf32, #tpu.memory_space<vmem>>, vector<8x128xf32>
    tpu.vector_store %arg7[%c0_20, %c0_21], %30 {strides = array<i32>} : memref<8x128xf32, #tpu.memory_space<vmem>>, vector<8x128xf32>,
    return
  }
  func.func @transform_0(%arg0: i32) -> (i32, i32) {
    %c0_i32 = arith.constant 0 : i32
    %c0_i32_0 = arith.constant 0 : i32
    return %arg0, %c0_i32 : i32, i32
  }
  func.func @transform_1(%arg0: i32) -> (i32, i32) {
    %c0_i32 = arith.constant 0 : i32
    %c0_i32_0 = arith.constant 0 : i32
    %c0_i32_1 = arith.constant 0 : i32
    return %c0_i32, %c0_i32_0 : i32, i32
  }
  func.func @transform_2(%arg0: i32) -> (i32, i32) {
    %c0_i32 = arith.constant 0 : i32
    %c0_i32_0 = arith.constant 0 : i32
    %c0_i32_1 = arith.constant 0 : i32
    return %c0_i32, %c0_i32_0 : i32, i32
  }
  func.func @transform_3(%arg0: i32) -> (i32, i32) {
    %c0_i32 = arith.constant 0 : i32
    %c0_i32_0 = arith.constant 0 : i32
    %c0_i32_1 = arith.constant 0 : i32
    return %c0_i32, %c0_i32_0 : i32, i32
  }
  func.func @transform_4(%arg0: i32) -> (i32, i32) {
    %c0_i32 = arith.constant 0 : i32
    %c0_i32_0 = arith.constant 0 : i32
    %c0_i32_1 = arith.constant 0 : i32
    return %c0_i32, %c0_i32_0 : i32, i32
  }
  func.func @transform_5(%arg0: i32) -> (i32, i32) {
    %c0_i32 = arith.constant 0 : i32
    %c0_i32_0 = arith.constant 0 : i32
    %c0_i32_1 = arith.constant 0 : i32
    return %c0_i32, %c0_i32_0 : i32, i32
  }
  func.func @transform_6(%arg0: i32) -> (i32, i32) {
    %c0_i32 = arith.constant 0 : i32
    %c0_i32_0 = arith.constant 0 : i32
    return %arg0, %c0_i32 : i32, i32
  }
}

</mosaic_0001>

<llo_original>
// kernel: tpu_custom_call.1
$region0: #{tpu_custom_call.1}
  #allocation0 [shape = 'u32[]', space=smem, size = 0x4, offset = 0x4, fixed_abs, tag = 'smem constant byte address 0x4 - core index']
  #allocation1 [shape = 'u32[144,128]{1,0:T(1,128)}', space=vmem, size = 0x12000, scoped, tag = 'internal scratch']
  %s0 = inlined_call_operand.vmem [shape: f32[8,4], index: 0, kind: input, shape index: {}]
  %s1 = inlined_call_operand.vmem [shape: bf16[4,128], index: 1, kind: input, shape index: {}]
  %s2 = inlined_call_operand.hbm [shape: bf16[128,256], index: 2, kind: input, shape index: {}]
  %s3 = inlined_call_operand.hbm [shape: bf16[256,128], index: 3, kind: input, shape index: {}]
  %s4 = inlined_call_operand.hbm [shape: bf16[128,128], index: 4, kind: input, shape index: {}]
  %s5 = inlined_call_operand.vmem [shape: f32[1,640], index: 5, kind: input, shape index: {}]
  %s6 = inlined_call_operand.hbm [shape: f32[8,128], index: 6, kind: output, shape index: {}]
  %s7 = sld [smem:[#allocation0]]
  $region46: #{tpu_custom_call.1} parent=0
    _
  %s9 = ssub.s32 1, %s7
  %s10 = scalar_select 0, %s9, %s7
  $region1: #{tpu_custom_call.1} parent=0
    #allocation2 [shape = 'u8[65536]{0}', space=vmem, size = 0x10000, scoped, tag = 'input window, operand 2, single buffered']
    #allocation3 [shape = 's32[1]{0}', space=sflag, size = 0x4, scoped, tag = 'scoped memory for tpu_custom_call.1']
    #allocation4 [shape = 's32[1]{0}', space=sflag, size = 0x4, scoped, tag = 'scoped memory for tpu_custom_call.1']
    #allocation5 [shape = 'u8[65536]{0}', space=vmem, size = 0x10000, scoped, tag = 'input window, operand 3, single buffered']
    #allocation6 [shape = 's32[1]{0}', space=sflag, size = 0x4, scoped, tag = 'scoped memory for tpu_custom_call.1']
    #allocation7 [shape = 'u8[32768]{0}', space=vmem, size = 0x8000, scoped, tag = 'input window, operand 4, single buffered']
    #allocation8 [shape = 'u8[4096]{0}', space=vmem, size = 0x1000, scoped, tag = 'output window, operand 0, single buffered']
    %11 = vsyncpa [#allocation3], 0
    %12 = vsyncpa [#allocation6], 0
    %13 = vsyncpa [#allocation4], 0
    // Predicated region
    $region2: #{tpu_custom_call.1} parent=1 // pred_check
      _
    $region3: #{tpu_custom_call.1} parent=1 // pred_check_branch
      %15 = sbr.rel (0) target = $region5
    $region4: #{tpu_custom_call.1} parent=1 // pred_region
      _
    $region5: #{tpu_custom_call.1} parent=1 // pred_fallthru
      _
    // Predicated region
    $region6: #{tpu_custom_call.1} parent=1 // pred_check
      _
    $region7: #{tpu_custom_call.1} parent=1 // pred_check_branch
      %17 = sbr.rel (0) target = $region9
    $region8: #{tpu_custom_call.1} parent=1 // pred_region
      _
    $region9: #{tpu_custom_call.1} parent=1 // pred_fallthru
      _
    // Predicated region
    $region10: #{tpu_custom_call.1} parent=1 // pred_check
      _
    $region11: #{tpu_custom_call.1} parent=1 // pred_check_branch
      %19 = sbr.rel (0) target = $region13
    $region12: #{tpu_custom_call.1} parent=1 // pred_region
      %s21 = ssub.s32 2048, 2048
      %22 = vsyncadd [#allocation3], %s21
      %s23 = sshll.u32 [#allocation2], 4
      %s24 = int_to_ptr.vmem [resolvable:$true] %s23
      %29 = dma.hbm_to_vmem [thread:$0]  %s2, 2048, %s24, [#allocation3], 128, 128, 8
    $region13: #{tpu_custom_call.1} parent=1 // pred_fallthru
      _
    // Predicated region
    $region14: #{tpu_custom_call.1} parent=1 // pred_check
      _
    $region15: #{tpu_custom_call.1} parent=1 // pred_check_branch
      %31 = sbr.rel (0) target = $region17
    $region16: #{tpu_custom_call.1} parent=1 // pred_region
      %s33 = ssub.s32 2048, 2048
      %34 = vsyncadd [#allocation6], %s33
      %s35 = sshll.u32 [#allocation5], 4
      %s36 = int_to_ptr.vmem [resolvable:$true] %s35
      %41 = dma.hbm_to_vmem [thread:$0]  %s3, 2048, %s36, [#allocation6], 64, 64, 4
    $region17: #{tpu_custom_call.1} parent=1 // pred_fallthru
      _
    // Predicated region
    $region18: #{tpu_custom_call.1} parent=1 // pred_check
      _
    $region19: #{tpu_custom_call.1} parent=1 // pred_check_branch
      %43 = sbr.rel (0) target = $region21
    $region20: #{tpu_custom_call.1} parent=1 // pred_region
      %s45 = ssub.s32 1024, 1024
      %46 = vsyncadd [#allocation6], %s45
      %s47 = sshll.u32 [#allocation7], 4
      %s48 = int_to_ptr.vmem [resolvable:$true] %s47
      %53 = dma.hbm_to_vmem [thread:$0]  %s4, 1024, %s48, [#allocation6], 64, 64, 4
    $region21: #{tpu_custom_call.1} parent=1 // pred_fallthru
      _
    // Predicated region
    $region22: #{tpu_custom_call.1} parent=1 // pred_check
      _
    $region23: #{tpu_custom_call.1} parent=1 // pred_check_branch
      %55 = sbr.rel (0) target = $region25
    $region24: #{tpu_custom_call.1} parent=1 // pred_region
      _
    $region25: #{tpu_custom_call.1} parent=1 // pred_fallthru
      _
    // Predicated region
    $region26: #{tpu_custom_call.1} parent=1 // pred_check
      _
    $region27: #{tpu_custom_call.1} parent=1 // pred_check_branch
      %57 = sbr.rel (0) target = $region29
    $region28: #{tpu_custom_call.1} parent=1 // pred_region
      %58 = dma.done [#allocation3], 2048
    $region29: #{tpu_custom_call.1} parent=1 // pred_fallthru
      _
    // Predicated region
    $region30: #{tpu_custom_call.1} parent=1 // pred_check
      _
    $region31: #{tpu_custom_call.1} parent=1 // pred_check_branch
      %60 = sbr.rel (0) target = $region33
    $region32: #{tpu_custom_call.1} parent=1 // pred_region
      %61 = dma.done [#allocation6], 2048
    $region33: #{tpu_custom_call.1} parent=1 // pred_fallthru
      _
    // Predicated region
    $region34: #{tpu_custom_call.1} parent=1 // pred_check
      _
    $region35: #{tpu_custom_call.1} parent=1 // pred_check_branch
      %63 = sbr.rel (0) target = $region37
    $region36: #{tpu_custom_call.1} parent=1 // pred_region
      %64 = dma.done [#allocation6], 1024
    $region37: #{tpu_custom_call.1} parent=1 // pred_fallthru
      _
    %v66 = vld [vmem:[%s5] sm:$0x1]
    %v67 = vld [vmem:[%s5 + $0x1] sm:$0x3]
    %v68 = vld [vmem:[%s5 + $0x3] sm:$0x1]
    %v69 = vld [vmem:[%s5 + $0x4] sm:$0x1]
    %v70 = vld [vmem:[%s0] sm:$0xff]
    %v71 = vpack.c.bf16 %v70, %v70
    %v72 = vld [vmem:[%s1] sm:$0x3]
    %v74 = vlaneseq
    %v75 = vshrl.u32 %v74, 7
    %v76 = vsub.s32 0, %v75
    %v77 = vrot.slane %v66, %v76
    %vm79 = vcmask 31744
    %v81 = vsel %vm79, %v71, 0
    %vm83 = vcmask 1041408
    %v85 = vsel %vm83, %v72, 0
    %87 = vmatprep.subr.bf16.mxu0 0
    %88 = vmatpush1.bf16.msra.mxu0 %v85
    %89 = vmatprep.subr.bf16.mxu0 0
    %90 = vmatpush1.bf16.msra.mxu0 0
    %91 = vmatprep.subr.bf16.mxu0 0
    %92 = vmatpush1.bf16.msra.mxu0 0
    %93 = vmatprep.subr.bf16.mxu0 0
    %94 = vmatpush1.bf16.msra.mxu0 0
    %95 = vmatprep.subr.bf16.mxu0 0
    %96 = vmatpush1.bf16.msra.mxu0 0
    %97 = vmatprep.subr.bf16.mxu0 0
    %98 = vmatpush1.bf16.msra.mxu0 0
    %99 = vmatprep.subr.bf16.mxu0 0
    %100 = vmatpush1.bf16.msra.mxu0 0
    %101 = vmatprep.subr.bf16.mxu0 0
    %102 = vmatpush1.bf16.msra.mxu0 0
    %103 = vmatprep.subr.bf16.mxu0 0
    %104 = vmatpush1.bf16.msra.mxu0 0
    %105 = vmatprep.subr.bf16.mxu0 0
    %106 = vmatpush1.bf16.msra.mxu0 0
    %107 = vmatprep.subr.bf16.mxu0 0
    %108 = vmatpush1.bf16.msra.mxu0 0
    %109 = vmatprep.subr.bf16.mxu0 0
    %110 = vmatpush1.bf16.msra.mxu0 0
    %111 = vmatprep.subr.bf16.mxu0 0
    %112 = vmatpush1.bf16.msra.mxu0 0
    %113 = vmatprep.subr.bf16.mxu0 0
    %114 = vmatpush1.bf16.msra.mxu0 0
    %115 = vmatprep.subr.bf16.mxu0 0
    %116 = vmatpush1.bf16.msra.mxu0 0
    %117 = vmatprep.subr.bf16.mxu0 0
    %118 = vmatpush1.bf16.msra.mxu0 0
    %119 = vmatprep.mubr.bf16.mxu0 0
    %120 = vmatmul.mubr.bf16.gmra.mrb[0].mxu0 %v81
    %v121 = vpop.f32.mrb[0].mxu0
    %v122 = vadd.f32 %v77, %v121
    %v123 = vpop.f32.mrb[0].mxu0
    %v124 = vpop.f32.mrb[0].mxu0
    %v125 = vpop.f32.mrb[0].mxu0
    %126 = vdwg.mxu0
    %v127 = vmax.f32 %v122, 0.0
    %v128 = vpack.c.bf16 %v127, %v127
    %v129 = vld [vmem:[#allocation2] sm:$0xff]
    %v130 = vld [vmem:[#allocation2 + $0x8] sm:$0xff]
    %v131 = vld [vmem:[#allocation2 + $0x10] sm:$0xff]
    %v132 = vld [vmem:[#allocation2 + $0x18] sm:$0xff]
    %v133 = vld [vmem:[#allocation2 + $0x20] sm:$0xff]
    %v134 = vld [vmem:[#allocation2 + $0x28] sm:$0xff]
    %v135 = vld [vmem:[#allocation2 + $0x30] sm:$0xff]
    %v136 = vld [vmem:[#allocation2 + $0x38] sm:$0xff]
    %v137 = vld [vmem:[#allocation2 + $0x40] sm:$0xff]
    %v138 = vld [vmem:[#allocation2 + $0x48] sm:$0xff]
    %v139 = vld [vmem:[#allocation2 + $0x50] sm:$0xff]
    %v140 = vld [vmem:[#allocation2 + $0x58] sm:$0xff]
    %v141 = vld [vmem:[#allocation2 + $0x60] sm:$0xff]
    %v142 = vld [vmem:[#allocation2 + $0x68] sm:$0xff]
    %v143 = vld [vmem:[#allocation2 + $0x70] sm:$0xff]
    %v144 = vld [vmem:[#allocation2 + $0x78] sm:$0xff]
    %v146 = vlaneseq
    %v147 = vshrl.u32 %v146, 7
    %v148 = vsub.s32 0, %v147
    %v149 = vrot.slane %v67, %v148
    %v150 = vlaneseq
    %v151 = vshrl.u32 %v150, 7
    %v152 = vsub.s32 1, %v151
    %v153 = vrot.slane %v67, %v152
    %v172 = vunpack.c.l.b16 %v129
    %v173 = vunpack.c.h.b16 %v129
    %v174 = vunpack.c.l.b16 %v130
    %v175 = vunpack.c.h.b16 %v130
    %v176 = vunpack.c.l.b16 %v131
    %v177 = vunpack.c.h.b16 %v131
    %v178 = vunpack.c.l.b16 %v132
    %v179 = vunpack.c.h.b16 %v132
    %v180 = vunpack.c.l.b16 %v133
    %v181 = vunpack.c.h.b16 %v133
    %v182 = vunpack.c.l.b16 %v134
    %v183 = vunpack.c.h.b16 %v134
    %v184 = vunpack.c.l.b16 %v135
    %v185 = vunpack.c.h.b16 %v135
    %v186 = vunpack.c.l.b16 %v136
    %v187 = vunpack.c.h.b16 %v136
    %v188 = vunpack.c.l.b16 %v137
    %v189 = vunpack.c.h.b16 %v137
    %v190 = vunpack.c.l.b16 %v138
    %v191 = vunpack.c.h.b16 %v138
    %v192 = vunpack.c.l.b16 %v139
    %v193 = vunpack.c.h.b16 %v139
    %v194 = vunpack.c.l.b16 %v140
    %v195 = vunpack.c.h.b16 %v140
    %v196 = vunpack.c.l.b16 %v141
    %v197 = vunpack.c.h.b16 %v141
    %v198 = vunpack.c.l.b16 %v142
    %v199 = vunpack.c.h.b16 %v142
    %v200 = vunpack.c.l.b16 %v143
    %v201 = vunpack.c.h.b16 %v143
    %v202 = vunpack.c.l.b16 %v144
    %v203 = vunpack.c.h.b16 %v144
    %v204 = vpack.c.b16 %v174, %v172
    %v205 = vpack.c.b16 %v175, %v173
    %v206 = vpack.c.b16 %v178, %v176
    %v207 = vpack.c.b16 %v179, %v177
    %v208 = vpack.c.b16 %v182, %v180
    %v209 = vpack.c.b16 %v183, %v181
    %v210 = vpack.c.b16 %v186, %v184
    %v211 = vpack.c.b16 %v187, %v185
    %v212 = vpack.c.b16 %v190, %v188
    %v213 = vpack.c.b16 %v191, %v189
    %v214 = vpack.c.b16 %v194, %v192
    %v215 = vpack.c.b16 %v195, %v193
    %v216 = vpack.c.b16 %v198, %v196
    %v217 = vpack.c.b16 %v199, %v197
    %v218 = vpack.c.b16 %v202, %v200
    %v219 = vpack.c.b16 %v203, %v201
    %236 = vmatprep.subr.bf16.mxu0 %v205
    %237 = vmatpush1.bf16.msra.mxu0 %v204
    %238 = vmatprep.subr.bf16.mxu0 %v207
    %239 = vmatpush1.bf16.msra.mxu0 %v206
    %240 = vmatprep.subr.bf16.mxu0 %v209
    %241 = vmatpush1.bf16.msra.mxu0 %v208
    %242 = vmatprep.subr.bf16.mxu0 %v211
    %243 = vmatpush1.bf16.msra.mxu0 %v210
    %244 = vmatprep.subr.bf16.mxu0 %v213
    %245 = vmatpush1.bf16.msra.mxu0 %v212
    %246 = vmatprep.subr.bf16.mxu0 %v215
    %247 = vmatpush1.bf16.msra.mxu0 %v214
    %248 = vmatprep.subr.bf16.mxu0 %v217
    %249 = vmatpush1.bf16.msra.mxu0 %v216
    %250 = vmatprep.subr.bf16.mxu0 %v219
    %251 = vmatpush1.bf16.msra.mxu0 %v218
    %252 = vmatprep.subr.bf16.mxu0 0
    %253 = vmatpush1.bf16.msra.mxu0 0
    %254 = vmatprep.subr.bf16.mxu0 0
    %255 = vmatpush1.bf16.msra.mxu0 0
    %256 = vmatprep.subr.bf16.mxu0 0
    %257 = vmatpush1.bf16.msra.mxu0 0
    %258 = vmatprep.subr.bf16.mxu0 0
    %259 = vmatpush1.bf16.msra.mxu0 0
    %260 = vmatprep.subr.bf16.mxu0 0
    %261 = vmatpush1.bf16.msra.mxu0 0
    %262 = vmatprep.subr.bf16.mxu0 0
    %263 = vmatpush1.bf16.msra.mxu0 0
    %264 = vmatprep.subr.bf16.mxu0 0
    %265 = vmatpush1.bf16.msra.mxu0 0
    %266 = vmatprep.subr.bf16.mxu0 0
    %267 = vmatpush1.bf16.msra.mxu0 0
    %268 = vmatprep.mubr.bf16.mxu0 0
    %269 = vmatmul.mubr.bf16.gmra.mrb[0].mxu0 %v128
    %v270 = vpop.f32.mrb[0].mxu0
    %v271 = vadd.f32 %v149, %v270
    %v272 = vpop.f32.mrb[0].mxu0
    %v273 = vadd.f32 %v153, %v272
    %v274 = vpop.f32.mrb[0].mxu0
    %v275 = vpop.f32.mrb[0].mxu0
    %276 = vdwg.mxu0
    %v277 = vmax.f32 %v271, 0.0
    %v278 = vmax.f32 %v273, 0.0
    %v279 = vpack.c.bf16 %v277, %v277
    %v280 = vpack.c.bf16 %v278, %v278
    %v281 = vld [vmem:[#allocation5] sm:$0xf]
    %v282 = vld [vmem:[#allocation5 + $0x4] sm:$0xf]
    %v283 = vld [vmem:[#allocation5 + $0x8] sm:$0xf]
    %v284 = vld [vmem:[#allocation5 + $0xc] sm:$0xf]
    %v285 = vld [vmem:[#allocation5 + $0x10] sm:$0xf]
    %v286 = vld [vmem:[#allocation5 + $0x14] sm:$0xf]
    %v287 = vld [vmem:[#allocation5 + $0x18] sm:$0xf]
    %v288 = vld [vmem:[#allocation5 + $0x1c] sm:$0xf]
    %v289 = vld [vmem:[#allocation5 + $0x20] sm:$0xf]
    %v290 = vld [vmem:[#allocation5 + $0x24] sm:$0xf]
    %v291 = vld [vmem:[#allocation5 + $0x28] sm:$0xf]
    %v292 = vld [vmem:[#allocation5 + $0x2c] sm:$0xf]
    %v293 = vld [vmem:[#allocation5 + $0x30] sm:$0xf]
    %v294 = vld [vmem:[#allocation5 + $0x34] sm:$0xf]
    %v295 = vld [vmem:[#allocation5 + $0x38] sm:$0xf]
    %v296 = vld [vmem:[#allocation5 + $0x3c] sm:$0xf]
    %v297 = vld [vmem:[#allocation5 + $0x40] sm:$0xf]
    %v298 = vld [vmem:[#allocation5 + $0x44] sm:$0xf]
    %v299 = vld [vmem:[#allocation5 + $0x48] sm:$0xf]
    %v300 = vld [vmem:[#allocation5 + $0x4c] sm:$0xf]
    %v301 = vld [vmem:[#allocation5 + $0x50] sm:$0xf]
    %v302 = vld [vmem:[#allocation5 + $0x54] sm:$0xf]
    %v303 = vld [vmem:[#allocation5 + $0x58] sm:$0xf]
    %v304 = vld [vmem:[#allocation5 + $0x5c] sm:$0xf]
    %v305 = vld [vmem:[#allocation5 + $0x60] sm:$0xf]
    %v306 = vld [vmem:[#allocation5 + $0x64] sm:$0xf]
    %v307 = vld [vmem:[#allocation5 + $0x68] sm:$0xf]
    %v308 = vld [vmem:[#allocation5 + $0x6c] sm:$0xf]
    %v309 = vld [vmem:[#allocation5 + $0x70] sm:$0xf]
    %v310 = vld [vmem:[#allocation5 + $0x74] sm:$0xf]
    %v311 = vld [vmem:[#allocation5 + $0x78] sm:$0xf]
    %v312 = vld [vmem:[#allocation5 + $0x7c] sm:$0xf]
    %v314 = vlaneseq
    %v315 = vshrl.u32 %v314, 7
    %v316 = vsub.s32 0, %v315
    %v317 = vrot.slane %v68, %v316
    %v351 = vunpack.c.l.b16 %v281
    %v352 = vunpack.c.l.b16 %v282
    %v353 = vunpack.c.l.b16 %v283
    %v354 = vunpack.c.l.b16 %v284
    %v355 = vunpack.c.l.b16 %v285
    %v356 = vunpack.c.l.b16 %v286
    %v357 = vunpack.c.l.b16 %v287
    %v358 = vunpack.c.l.b16 %v288
    %v359 = vunpack.c.l.b16 %v289
    %v360 = vunpack.c.l.b16 %v290
    %v361 = vunpack.c.l.b16 %v291
    %v362 = vunpack.c.l.b16 %v292
    %v363 = vunpack.c.l.b16 %v293
    %v364 = vunpack.c.l.b16 %v294
    %v365 = vunpack.c.l.b16 %v295
    %v366 = vunpack.c.l.b16 %v296
    %v367 = vunpack.c.l.b16 %v297
    %v368 = vunpack.c.l.b16 %v298
    %v369 = vunpack.c.l.b16 %v299
    %v370 = vunpack.c.l.b16 %v300
    %v371 = vunpack.c.l.b16 %v301
    %v372 = vunpack.c.l.b16 %v302
    %v373 = vunpack.c.l.b16 %v303
    %v374 = vunpack.c.l.b16 %v304
    %v375 = vunpack.c.l.b16 %v305
    %v376 = vunpack.c.l.b16 %v306
    %v377 = vunpack.c.l.b16 %v307
    %v378 = vunpack.c.l.b16 %v308
    %v379 = vunpack.c.l.b16 %v309
    %v380 = vunpack.c.l.b16 %v310
    %v381 = vunpack.c.l.b16 %v311
    %v382 = vunpack.c.l.b16 %v312
    %v383 = vpack.c.b16 %v352, %v351
    %v384 = vpack.c.b16 %v354, %v353
    %v385 = vpack.c.b16 %v356, %v355
    %v386 = vpack.c.b16 %v358, %v357
    %v387 = vpack.c.b16 %v360, %v359
    %v388 = vpack.c.b16 %v362, %v361
    %v389 = vpack.c.b16 %v364, %v363
    %v390 = vpack.c.b16 %v366, %v365
    %v391 = vpack.c.b16 %v368, %v367
    %v392 = vpack.c.b16 %v370, %v369
    %v393 = vpack.c.b16 %v372, %v371
    %v394 = vpack.c.b16 %v374, %v373
    %v395 = vpack.c.b16 %v376, %v375
    %v396 = vpack.c.b16 %v378, %v377
    %v397 = vpack.c.b16 %v380, %v379
    %v398 = vpack.c.b16 %v382, %v381
    %415 = vmatprep.subr.bf16.mxu0 0
    %416 = vmatpush1.bf16.msra.mxu0 %v383
    %417 = vmatprep.subr.bf16.mxu0 0
    %418 = vmatpush1.bf16.msra.mxu0 %v384
    %419 = vmatprep.subr.bf16.mxu0 0
    %420 = vmatpush1.bf16.msra.mxu0 %v385
    %421 = vmatprep.subr.bf16.mxu0 0
    %422 = vmatpush1.bf16.msra.mxu0 %v386
    %423 = vmatprep.subr.bf16.mxu0 0
    %424 = vmatpush1.bf16.msra.mxu0 %v387
    %425 = vmatprep.subr.bf16.mxu0 0
    %426 = vmatpush1.bf16.msra.mxu0 %v388
    %427 = vmatprep.subr.bf16.mxu0 0
    %428 = vmatpush1.bf16.msra.mxu0 %v389
    %429 = vmatprep.subr.bf16.mxu0 0
    %430 = vmatpush1.bf16.msra.mxu0 %v390
    %431 = vmatprep.subr.bf16.mxu0 0
    %432 = vmatpush1.bf16.msra.mxu0 %v391
    %433 = vmatprep.subr.bf16.mxu0 0
    %434 = vmatpush1.bf16.msra.mxu0 %v392
    %435 = vmatprep.subr.bf16.mxu0 0
    %436 = vmatpush1.bf16.msra.mxu0 %v393
    %437 = vmatprep.subr.bf16.mxu0 0
    %438 = vmatpush1.bf16.msra.mxu0 %v394
    %439 = vmatprep.subr.bf16.mxu0 0
    %440 = vmatpush1.bf16.msra.mxu0 %v395
    %441 = vmatprep.subr.bf16.mxu0 0
    %442 = vmatpush1.bf16.msra.mxu0 %v396
    %443 = vmatprep.subr.bf16.mxu0 0
    %444 = vmatpush1.bf16.msra.mxu0 %v397
    %445 = vmatprep.subr.bf16.mxu0 0
    %446 = vmatpush1.bf16.msra.mxu0 %v398
    %447 = vmatprep.mubr.bf16.mxu0 %v280
    %448 = vmatmul.mubr.bf16.gmra.mrb[0].mxu0 %v279
    %v449 = vpop.f32.mrb[0].mxu0
    %v450 = vadd.f32 %v317, %v449
    %v451 = vpop.f32.mrb[0].mxu0
    %v452 = vpop.f32.mrb[0].mxu0
    %v453 = vpop.f32.mrb[0].mxu0
    %454 = vdwg.mxu0
    %v455 = vmax.f32 %v450, 0.0
    %v456 = vpack.c.bf16 %v455, %v455
    %v457 = vld [vmem:[#allocation7] sm:$0xf]
    %v458 = vld [vmem:[#allocation7 + $0x4] sm:$0xf]
    %v459 = vld [vmem:[#allocation7 + $0x8] sm:$0xf]
    %v460 = vld [vmem:[#allocation7 + $0xc] sm:$0xf]
    %v461 = vld [vmem:[#allocation7 + $0x10] sm:$0xf]
    %v462 = vld [vmem:[#allocation7 + $0x14] sm:$0xf]
    %v463 = vld [vmem:[#allocation7 + $0x18] sm:$0xf]
    %v464 = vld [vmem:[#allocation7 + $0x1c] sm:$0xf]
    %v465 = vld [vmem:[#allocation7 + $0x20] sm:$0xf]
    %v466 = vld [vmem:[#allocation7 + $0x24] sm:$0xf]
    %v467 = vld [vmem:[#allocation7 + $0x28] sm:$0xf]
    %v468 = vld [vmem:[#allocation7 + $0x2c] sm:$0xf]
    %v469 = vld [vmem:[#allocation7 + $0x30] sm:$0xf]
    %v470 = vld [vmem:[#allocation7 + $0x34] sm:$0xf]
    %v471 = vld [vmem:[#allocation7 + $0x38] sm:$0xf]
    %v472 = vld [vmem:[#allocation7 + $0x3c] sm:$0xf]
    %v474 = vlaneseq
    %v475 = vshrl.u32 %v474, 7
    %v476 = vsub.s32 0, %v475
    %v477 = vrot.slane %v69, %v476
    %v495 = vunpack.c.l.b16 %v457
    %v496 = vunpack.c.l.b16 %v458
    %v497 = vunpack.c.l.b16 %v459
    %v498 = vunpack.c.l.b16 %v460
    %v499 = vunpack.c.l.b16 %v461
    %v500 = vunpack.c.l.b16 %v462
    %v501 = vunpack.c.l.b16 %v463
    %v502 = vunpack.c.l.b16 %v464
    %v503 = vunpack.c.l.b16 %v465
    %v504 = vunpack.c.l.b16 %v466
    %v505 = vunpack.c.l.b16 %v467
    %v506 = vunpack.c.l.b16 %v468
    %v507 = vunpack.c.l.b16 %v469
    %v508 = vunpack.c.l.b16 %v470
    %v509 = vunpack.c.l.b16 %v471
    %v510 = vunpack.c.l.b16 %v472
    %v511 = vpack.c.b16 %v496, %v495
    %v512 = vpack.c.b16 %v498, %v497
    %v513 = vpack.c.b16 %v500, %v499
    %v514 = vpack.c.b16 %v502, %v501
    %v515 = vpack.c.b16 %v504, %v503
    %v516 = vpack.c.b16 %v506, %v505
    %v517 = vpack.c.b16 %v508, %v507
    %v518 = vpack.c.b16 %v510, %v509
    %527 = vmatprep.subr.bf16.mxu0 0
    %528 = vmatpush1.bf16.msra.mxu0 %v511
    %529 = vmatprep.subr.bf16.mxu0 0
    %530 = vmatpush1.bf16.msra.mxu0 %v512
    %531 = vmatprep.subr.bf16.mxu0 0
    %532 = vmatpush1.bf16.msra.mxu0 %v513
    %533 = vmatprep.subr.bf16.mxu0 0
    %534 = vmatpush1.bf16.msra.mxu0 %v514
    %535 = vmatprep.subr.bf16.mxu0 0
    %536 = vmatpush1.bf16.msra.mxu0 %v515
    %537 = vmatprep.subr.bf16.mxu0 0
    %538 = vmatpush1.bf16.msra.mxu0 %v516
    %539 = vmatprep.subr.bf16.mxu0 0
    %540 = vmatpush1.bf16.msra.mxu0 %v517
    %541 = vmatprep.subr.bf16.mxu0 0
    %542 = vmatpush1.bf16.msra.mxu0 %v518
    %543 = vmatprep.subr.bf16.mxu0 0
    %544 = vmatpush1.bf16.msra.mxu0 0
    %545 = vmatprep.subr.bf16.mxu0 0
    %546 = vmatpush1.bf16.msra.mxu0 0
    %547 = vmatprep.subr.bf16.mxu0 0
    %548 = vmatpush1.bf16.msra.mxu0 0
    %549 = vmatprep.subr.bf16.mxu0 0
    %550 = vmatpush1.bf16.msra.mxu0 0
    %551 = vmatprep.subr.bf16.mxu0 0
    %552 = vmatpush1.bf16.msra.mxu0 0
    %553 = vmatprep.subr.bf16.mxu0 0
    %554 = vmatpush1.bf16.msra.mxu0 0
    %555 = vmatprep.subr.bf16.mxu0 0
    %556 = vmatpush1.bf16.msra.mxu0 0
    %557 = vmatprep.subr.bf16.mxu0 0
    %558 = vmatpush1.bf16.msra.mxu0 0
    %559 = vmatprep.mubr.bf16.mxu0 0
    %560 = vmatmul.mubr.bf16.gmra.mrb[0].mxu0 %v456
    %v561 = vpop.f32.mrb[0].mxu0
    %v562 = vadd.f32 %v477, %v561
    %v563 = vpop.f32.mrb[0].mxu0
    %v564 = vpop.f32.mrb[0].mxu0
    %v565 = vpop.f32.mrb[0].mxu0
    %566 = vdwg.mxu0
    %567 = vst [vmem:[#allocation8] sm:$0xff] %v562
    // Predicated region
    $region38: #{tpu_custom_call.1} parent=1 // pred_check
      _
    $region39: #{tpu_custom_call.1} parent=1 // pred_check_branch
      %569 = sbr.rel (0) target = $region41
    $region40: #{tpu_custom_call.1} parent=1 // pred_region
      %s571 = ssub.s32 128, 128
      %572 = vsyncadd [#allocation4], %s571
      %s574 = sshll.u32 [#allocation8], 4
      %s575 = int_to_ptr.vmem [resolvable:$true] %s574
      %577 = dma.vmem_to_hbm [thread:$0]  %s575, 128, %s6, [#allocation4]
    $region41: #{tpu_custom_call.1} parent=1 // pred_fallthru
      _
    // Predicated region
    $region42: #{tpu_custom_call.1} parent=1 // pred_check
      _
    $region43: #{tpu_custom_call.1} parent=1 // pred_check_branch
      %579 = sbr.rel (0) target = $region45
    $region44: #{tpu_custom_call.1} parent=1 // pred_region
      %580 = dma.done [#allocation4], 128
    $region45: #{tpu_custom_call.1} parent=1 // pred_fallthru
      _
    %581 = vsyncpa [#allocation3], 1
    %582 = vsyncpa [#allocation6], 1
    %583 = vsyncpa [#allocation4], 1

</llo_original>
